<compile_context>
chip_gen: v5e
topology: v5e:2x2
jax: 0.10.0
libtpu: 0.0.40
codegen_flags: <defaults>
</compile_context>

<pallas_src>
import functools

import jax
import jax.numpy as jnp
from jax.experimental import pallas as pl
from jax.experimental.pallas import tpu as pltpu


# ----------------------------------------------------------------------------
# Fused kernel: im2row conv (all filter banks) + masked max pool + bias + ReLU
#               + final linear, for one batch tile.
# ----------------------------------------------------------------------------
def _textcnn_fused_kernel(embed_ref, wconv_ref, bconv_ref, lim_ref,
                          wfc_ref, bfc_ref, out_ref, *, max_k, n_rows):
    # embed_ref: [Bt, Lp, E]      (Lp = L + max_k - min_k, zero-padded seq)
    # wconv_ref: [max_k*E, NF]    (NF = num_filters * num_filter_sizes,
    #                              rows j*E+e, zero rows for taps >= bank k)
    # bconv_ref: [1, NF]          lim_ref: [1, NF] int32 (valid positions/bank)
    # wfc_ref:   [NF, C]          bfc_ref: [1, C]        out_ref: [Bt, C]
    Bt, Lp, E = embed_ref.shape
    KE, NF = wconv_ref.shape

    x = embed_ref[...]                                          # [Bt, Lp, E]

    # im2row: window matrix [Bt, n_rows, max_k*E] built once, one big matmul.
    win = jnp.concatenate([x[:, j:j + n_rows, :] for j in range(max_k)],
                          axis=-1)
    win = win.reshape(Bt * n_rows, KE)

    acc = jnp.dot(win, wconv_ref[...],
                  preferred_element_type=jnp.float32)           # [Bt*n_rows, NF]
    acc = acc.reshape(Bt, n_rows, NF)

    # Mask positions that are invalid for each filter bank, then global max
    # pool over the sequence positions.
    pos = jax.lax.broadcasted_iota(jnp.int32, (Bt, n_rows, NF), 1)
    lim = lim_ref[...].reshape(1, 1, NF)
    neg = jnp.float32(-3.0e38)
    pooled = jnp.max(jnp.where(pos < lim, acc, neg), axis=1)    # [Bt, NF]

    # Bias + ReLU hoisted past the max (max(x+b)=max(x)+b, relu monotone).
    pooled = jnp.maximum(pooled + bconv_ref[...], 0.0)

    # Dropout: identity in eval mode.
    # TODO(synk): training-mode dropout (random mask + 1/(1-p) scaling).

    out_ref[...] = (jnp.dot(pooled, wfc_ref[...],
                            preferred_element_type=jnp.float32)
                    + bfc_ref[...])                             # [Bt, C]


# ----------------------------------------------------------------------------
# Host-side helpers
# ----------------------------------------------------------------------------
def _pick_batch_tile(B, Lp, E, max_k, budget_bytes=10 << 20):
    """Batch tile sized against a conservative VMEM budget (fits v7x too)."""
    # Rough per-batch-row VMEM: double-buffered embed block + im2row window
    # + accumulator (~max_k + 5 copies of an L*E f32 row).
    per_row = Lp * E * 4 * (max_k + 5)
    bt = max(1, budget_bytes // per_row)
    bt = min(bt, 128, B)
    if bt < B:
        # When tiling the batch, keep the output block sublane-friendly.
        bt = max(8, (bt // 8) * 8)
    return bt


def _pack_fused_conv(params, filter_sizes, E, F, L):
    """Pack per-filter-size conv weights/biases into one fused bank."""
    max_k = max(filter_sizes)
    NF = F * len(filter_sizes)
    w = jnp.zeros((max_k * E, NF), jnp.float32)
    b = jnp.zeros((1, NF), jnp.float32)
    lim = jnp.zeros((1, NF), jnp.int32)
    for i, k in enumerate(filter_sizes):
        w = w.at[: k * E, i * F:(i + 1) * F].set(params[f"conv{k}_w"])
        b = b.at[:, i * F:(i + 1) * F].set(params[f"conv{k}_b"])
        lim = lim.at[:, i * F:(i + 1) * F].set(L - k + 1)
    return w, b, lim


# ----------------------------------------------------------------------------
# TextCNN forward
# ----------------------------------------------------------------------------
def textcnn_forward(token_ids, params, filter_sizes):
    B, L = token_ids.shape
    filter_sizes = tuple(filter_sizes)
    max_k, min_k = max(filter_sizes), min(filter_sizes)
    assert L >= max_k, "sequence length must be >= largest filter size"

    E = params["embedding"].shape[1]
    F = params[f"conv{filter_sizes[0]}_b"].shape[-1]
    NF = F * len(filter_sizes)
    C = params["fc_b"].shape[-1]

    Lp = L + (max_k - min_k)          # seq padding so every tap slice is in-bounds
    n_rows = L - min_k + 1            # positions covering all filter sizes

    bt = _pick_batch_tile(B, Lp, E, max_k)
    B_pad = -(-B // bt) * bt

    ids = token_ids
    if B_pad != B or Lp != L:
        ids = jnp.pad(ids, ((0, B_pad - B), (0, Lp - L)))

    # Embedding lookup (plain XLA gather): [B_pad, Lp] -> [B_pad, Lp, E]
    # TODO(synk): in-kernel embedding gather (scalar-prefetch ids + HBM DMA).
    embed = jnp.take(params["embedding"], ids, axis=0).astype(jnp.float32)

    wconv, bconv, limits = _pack_fused_conv(params, filter_sizes, E, F, L)

    kernel = functools.partial(_textcnn_fused_kernel, max_k=max_k, n_rows=n_rows)
    out = pl.pallas_call(
        kernel,
        out_shape=jax.ShapeDtypeStruct((B_pad, C), jnp.float32),
        grid_spec=pltpu.PrefetchScalarGridSpec(
            num_scalar_prefetch=0,
            grid=(B_pad // bt,),
            in_specs=[
                pl.BlockSpec((bt, Lp, E), lambda i: (i, 0, 0)),        # embed tile
                pl.BlockSpec((max_k * E, NF), lambda i: (0, 0)),       # conv weights
                pl.BlockSpec((1, NF), lambda i: (0, 0)),               # conv bias
                pl.BlockSpec((1, NF), lambda i: (0, 0)),               # pool limits
                pl.BlockSpec((NF, C), lambda i: (0, 0)),               # fc weight
                pl.BlockSpec((1, C), lambda i: (0, 0)),                # fc bias
            ],
            out_specs=pl.BlockSpec((bt, C), lambda i: (i, 0)),
        ),
        compiler_params=pltpu.CompilerParams(
            dimension_semantics=("parallel",)),
    )(embed, wconv, bconv, limits, params["fc_w"], params["fc_b"])

    return out[:B]


# ----------------------------------------------------------------------------
# Pure-JAX reference (mirrors the PyTorch module) for a correctness check
# ----------------------------------------------------------------------------
def reference_forward(token_ids, params, filter_sizes):
    embed = params["embedding"][token_ids].astype(jnp.float32)   # [B, L, E]
    B, L, E = embed.shape
    pooled = []
    for k in filter_sizes:
        w = params[f"conv{k}_w"]                                  # [k*E, F]
        b = params[f"conv{k}_b"]                                  # [1, F]
        n_pos = L - k + 1
        win = jnp.stack([embed[:, j:j + n_pos, :] for j in range(k)], axis=2)
        win = win.reshape(B, n_pos, k * E)
        conv = jnp.einsum("bpd,df->bpf", win, w,
                          preferred_element_type=jnp.float32) + b
        pooled.append(jnp.max(jax.nn.relu(conv), axis=1))
    out = jnp.concatenate(pooled, axis=1)
    return out @ params["fc_w"] + params["fc_b"]


# ----------------------------------------------------------------------------
# Deterministic parameter init (PyTorch shapes, synthetic values)
# ----------------------------------------------------------------------------
def init_params(key, vocab_size, embedding_size, num_filters, filter_sizes,
                num_classes):
    params = {}
    keys = jax.random.split(key, 2 + 2 * len(filter_sizes) + 2)
    it = iter(keys)

    # nn.Embedding(vocab_size, embedding_size)
    params["embedding"] = 0.02 * jax.random.normal(
        next(it), (vocab_size, embedding_size), jnp.float32)

    # nn.Conv2d(1, num_filters, kernel_size=(k, embedding_size))
    #   PyTorch weight: [F, 1, k, E]; flatten to [F, k*E] then transpose -> [k*E, F]
    for k in filter_sizes:
        w_torch = 0.1 * jax.random.normal(
            next(it), (num_filters, 1, k, embedding_size), jnp.float32)
        params[f"conv{k}_w"] = w_torch.reshape(num_filters, k * embedding_size).T
        params[f"conv{k}_b"] = 0.01 * jax.random.normal(
            next(it), (1, num_filters), jnp.float32)

    # nn.Linear(num_filters * len(filter_sizes), num_classes)
    d = num_filters * len(filter_sizes)
    params["fc_w"] = (0.1 * jax.random.normal(
        next(it), (num_classes, d), jnp.float32)).T
    params["fc_b"] = 0.01 * jax.random.normal(
        next(it), (1, num_classes), jnp.float32)
    return params


if __name__ == "__main__":
    # Small shapes consistent with the module's forward.
    batch = 2
    seq_len = 16
    vocab_size = 100
    embedding_size = 32
    num_filters = 16
    filter_sizes = (2, 3, 4, 5)
    num_classes = 2

    key = jax.random.PRNGKey(0)
    k_params, k_ids = jax.random.split(key)

    params = init_params(k_params, vocab_size, embedding_size, num_filters,
                         filter_sizes, num_classes)
    token_ids = jax.random.randint(k_ids, (batch, seq_len), 0, vocab_size,
                                   dtype=jnp.int32)

    fwd = jax.jit(functools.partial(textcnn_forward, filter_sizes=filter_sizes))
    logits = fwd(token_ids, params)
    jax.block_until_ready(logits)
    assert logits.shape == (batch, num_classes), logits.shape

    ref = reference_forward(token_ids, params, filter_sizes)
    max_err = float(jnp.max(jnp.abs(logits - ref)))
    assert max_err < 2e-3, f"kernel/reference mismatch: max abs err {max_err}"

    print("KERNEL_OK")
</pallas_src>

<mosaic_0001>
module attributes {stable_mosaic.version = 11 : i64} {
  func.func @_textcnn_fused_kernel(%arg0: i32, %arg1: memref<2x19x32xf32, #tpu.memory_space<vmem>>, %arg2: memref<160x64xf32, #tpu.memory_space<vmem>>, %arg3: memref<1x64xf32, #tpu.memory_space<vmem>>, %arg4: memref<1x64xi32, #tpu.memory_space<vmem>>, %arg5: memref<64x2xf32, #tpu.memory_space<vmem>>, %arg6: memref<1x2xf32, #tpu.memory_space<vmem>>, %arg7: memref<2x2xf32, #tpu.memory_space<vmem>>) attributes {dimension_semantics = [#tpu.dimension_semantics<parallel>], iteration_bounds = array<i64: 1>, scalar_prefetch = 0 : i64, scratch_operands = 0 : i64, tpu.core_type = #tpu.core_type<tc>, window_params = [{transform_indices = @transform_0, window_bounds = array<i64: 2, 19, 32>}, {pipeline_mode = #tpu.pipeline_mode<synchronous>, transform_indices = @transform_1, window_bounds = array<i64: 160, 64>}, {pipeline_mode = #tpu.pipeline_mode<synchronous>, transform_indices = @transform_2, window_bounds = array<i64: 1, 64>}, {pipeline_mode = #tpu.pipeline_mode<synchronous>, transform_indices = @transform_3, window_bounds = array<i64: 1, 64>}, {pipeline_mode = #tpu.pipeline_mode<synchronous>, transform_indices = @transform_4, window_bounds = array<i64: 64, 2>}, {pipeline_mode = #tpu.pipeline_mode<synchronous>, transform_indices = @transform_5, window_bounds = array<i64: 1, 2>}, {transform_indices = @transform_6, window_bounds = array<i64: 2, 2>}]} {
    %c0 = arith.constant 0 : index
    %c0_0 = arith.constant 0 : index
    %c0_1 = arith.constant 0 : index
    %0 = vector.load %arg1[%c0, %c0_0, %c0_1] : memref<2x19x32xf32, #tpu.memory_space<vmem>>, vector<2x19x32xf32>
    %1 = vector.extract_strided_slice %0 {offsets = [0, 0, 0], sizes = [2, 15, 32], strides = [1, 1, 1]} : vector<2x19x32xf32> to vector<2x15x32xf32>
    %2 = vector.extract_strided_slice %0 {offsets = [0, 1, 0], sizes = [2, 15, 32], strides = [1, 1, 1]} : vector<2x19x32xf32> to vector<2x15x32xf32>
    %3 = vector.extract_strided_slice %0 {offsets = [0, 2, 0], sizes = [2, 15, 32], strides = [1, 1, 1]} : vector<2x19x32xf32> to vector<2x15x32xf32>
    %4 = vector.extract_strided_slice %0 {offsets = [0, 3, 0], sizes = [2, 15, 32], strides = [1, 1, 1]} : vector<2x19x32xf32> to vector<2x15x32xf32>
    %5 = vector.extract_strided_slice %0 {offsets = [0, 4, 0], sizes = [2, 15, 32], strides = [1, 1, 1]} : vector<2x19x32xf32> to vector<2x15x32xf32>
    %6 = tpu.concatenate %1, %2, %3, %4, %5 in 2 : vector<2x15x32xf32>, vector<2x15x32xf32>, vector<2x15x32xf32>, vector<2x15x32xf32>, vector<2x15x32xf32> -> vector<2x15x160xf32>
    %7 = vector.shape_cast %6 : vector<2x15x160xf32> to vector<30x160xf32>
    %c0_2 = arith.constant 0 : index
    %c0_3 = arith.constant 0 : index
    %8 = vector.load %arg2[%c0_2, %c0_3] : memref<160x64xf32, #tpu.memory_space<vmem>>, vector<160x64xf32>
    %cst = arith.constant dense<0.000000e+00> : vector<30x64xf32>
    %9 = tpu.matmul %7, %8, %cst {dimension_numbers = #tpu.dot_dimension_numbers<[1], [0], [0], [1], [0, 0, 1, 1], [], []>} : vector<30x160xf32>, vector<160x64xf32>, vector<30x64xf32> -> vector<30x64xf32>
    %10 = vector.shape_cast %9 : vector<30x64xf32> to vector<2x15x64xf32>
    %11 = tpu.iota {dimensions = array<i32: 1>} : vector<2x15x64xi32>
    %c0_4 = arith.constant 0 : index
    %c0_5 = arith.constant 0 : index
    %12 = vector.load %arg4[%c0_4, %c0_5] : memref<1x64xi32, #tpu.memory_space<vmem>>, vector<1x64xi32>
    %13 = vector.shape_cast %12 : vector<1x64xi32> to vector<1x1x64xi32>
    %14 = vector.broadcast %13 : vector<1x1x64xi32> to vector<2x15x64xi32>
    %15 = arith.cmpi slt, %11, %14 : vector<2x15x64xi32>
    %cst_6 = arith.constant -3.000000e+38 : f32
    %16 = vector.broadcast %cst_6 : f32 to vector<2x15x64xf32>
    %17 = arith.select %15, %10, %16 : vector<2x15x64xi1>, vector<2x15x64xf32>
    %cst_7 = arith.constant dense<0xFF800000> : vector<2x64xf32>
    %18 = vector.multi_reduction <maximumf>, %17, %cst_7 [1] : vector<2x15x64xf32> to vector<2x64xf32>
    %c0_8 = arith.constant 0 : index
    %c0_9 = arith.constant 0 : index
    %19 = vector.load %arg3[%c0_8, %c0_9] : memref<1x64xf32, #tpu.memory_space<vmem>>, vector<1x64xf32>
    %20 = vector.broadcast %19 : vector<1x64xf32> to vector<2x64xf32>
    %21 = arith.addf %18, %20 : vector<2x64xf32>
    %cst_10 = arith.constant 0.000000e+00 : f32
    %22 = vector.broadcast %cst_10 : f32 to vector<2x64xf32>
    %23 = arith.maximumf %21, %22 : vector<2x64xf32>
    %c0_11 = arith.constant 0 : index
    %c0_12 = arith.constant 0 : index
    %24 = vector.load %arg5[%c0_11, %c0_12] : memref<64x2xf32, #tpu.memory_space<vmem>>, vector<64x2xf32>
    %cst_13 = arith.constant dense<0.000000e+00> : vector<2x2xf32>
    %25 = tpu.matmul %23, %24, %cst_13 {dimension_numbers = #tpu.dot_dimension_numbers<[1], [0], [0], [1], [0, 0, 1, 1], [], []>} : vector<2x64xf32>, vector<64x2xf32>, vector<2x2xf32> -> vector<2x2xf32>
    %c0_14 = arith.constant 0 : index
    %c0_15 = arith.constant 0 : index
    %26 = vector.load %arg6[%c0_14, %c0_15] : memref<1x2xf32, #tpu.memory_space<vmem>>, vector<1x2xf32>
    %27 = vector.broadcast %26 : vector<1x2xf32> to vector<2x2xf32>
    %28 = arith.addf %25, %27 : vector<2x2xf32>
    %c0_16 = arith.constant 0 : index
    %c0_17 = arith.constant 0 : index
    %29 = vector.load %arg7[%c0_16, %c0_17] : memref<2x2xf32, #tpu.memory_space<vmem>>, vector<2x2xf32>
    tpu.vector_store %arg7[%c0_16, %c0_17], %28 {strides = array<i32>} : memref<2x2xf32, #tpu.memory_space<vmem>>, vector<2x2xf32>,
    return
  }
  func.func @transform_0(%arg0: i32) -> (i32, i32, i32) {
    %c0_i32 = arith.constant 0 : i32
    %c0_i32_0 = arith.constant 0 : i32
    %c0_i32_1 = arith.constant 0 : i32
    return %arg0, %c0_i32, %c0_i32_0 : i32, i32, i32
  }
  func.func @transform_1(%arg0: i32) -> (i32, i32) {
    %c0_i32 = arith.constant 0 : i32
    %c0_i32_0 = arith.constant 0 : i32
    %c0_i32_1 = arith.constant 0 : i32
    return %c0_i32, %c0_i32_0 : i32, i32
  }
  func.func @transform_2(%arg0: i32) -> (i32, i32) {
    %c0_i32 = arith.constant 0 : i32
    %c0_i32_0 = arith.constant 0 : i32
    %c0_i32_1 = arith.constant 0 : i32
    return %c0_i32, %c0_i32_0 : i32, i32
  }
  func.func @transform_3(%arg0: i32) -> (i32, i32) {
    %c0_i32 = arith.constant 0 : i32
    %c0_i32_0 = arith.constant 0 : i32
    %c0_i32_1 = arith.constant 0 : i32
    return %c0_i32, %c0_i32_0 : i32, i32
  }
  func.func @transform_4(%arg0: i32) -> (i32, i32) {
    %c0_i32 = arith.constant 0 : i32
    %c0_i32_0 = arith.constant 0 : i32
    %c0_i32_1 = arith.constant 0 : i32
    return %c0_i32, %c0_i32_0 : i32, i32
  }
  func.func @transform_5(%arg0: i32) -> (i32, i32) {
    %c0_i32 = arith.constant 0 : i32
    %c0_i32_0 = arith.constant 0 : i32
    %c0_i32_1 = arith.constant 0 : i32
    return %c0_i32, %c0_i32_0 : i32, i32
  }
  func.func @transform_6(%arg0: i32) -> (i32, i32) {
    %c0_i32 = arith.constant 0 : i32
    %c0_i32_0 = arith.constant 0 : i32
    return %arg0, %c0_i32 : i32, i32
  }
}

</mosaic_0001>

<llo_original>
// kernel: textcnn_forward.1
$region0: #{textcnn_forward.1}
  #allocation0 [shape = 'u32[]', space=smem, size = 0x4, offset = 0x4, fixed_abs, tag = 'smem constant byte address 0x4 - core index']
  #allocation1 [shape = 'u32[72,128]{1,0:T(1,128)}', space=vmem, size = 0x9000, scoped, tag = 'internal scratch']
  %s0 = inlined_call_operand.vmem [shape: f32[2,19,32], index: 0, kind: input, shape index: {}]
  %s1 = inlined_call_operand.vmem [shape: f32[160,64], index: 1, kind: input, shape index: {}]
  %s2 = inlined_call_operand.vmem [shape: f32[1,64], index: 2, kind: input, shape index: {}]
  %s3 = inlined_call_operand.vmem [shape: s32[1,64], index: 3, kind: input, shape index: {}]
  %s4 = inlined_call_operand.vmem [shape: f32[64,2], index: 4, kind: input, shape index: {}]
  %s5 = inlined_call_operand.vmem [shape: f32[1,2], index: 5, kind: input, shape index: {}]
  %s6 = inlined_call_operand.hbm [shape: f32[2,2], index: 6, kind: output, shape index: {}]
  %s7 = sld [smem:[#allocation0]]
  $region34: #{textcnn_forward.1} parent=0
    _
  %s9 = ssub.s32 1, %s7
  %s10 = scalar_select 0, %s9, %s7
  $region1: #{textcnn_forward.1} parent=0
    #allocation2 [shape = 'u8[1024]{0}', space=vmem, size = 0x400, scoped, tag = 'output window, operand 0, single buffered']
    #allocation3 [shape = 's32[1]{0}', space=sflag, size = 0x4, scoped, tag = 'scoped memory for textcnn_forward.1']
    %11 = vsyncpa [#allocation3], 0
    // Predicated region
    $region2: #{textcnn_forward.1} parent=1 // pred_check
      _
    $region3: #{textcnn_forward.1} parent=1 // pred_check_branch
      %13 = sbr.rel (0) target = $region5
    $region4: #{textcnn_forward.1} parent=1 // pred_region
      _
    $region5: #{textcnn_forward.1} parent=1 // pred_fallthru
      _
    // Predicated region
    $region6: #{textcnn_forward.1} parent=1 // pred_check
      _
    $region7: #{textcnn_forward.1} parent=1 // pred_check_branch
      %15 = sbr.rel (0) target = $region9
    $region8: #{textcnn_forward.1} parent=1 // pred_region
      _
    $region9: #{textcnn_forward.1} parent=1 // pred_fallthru
      _
    // Predicated region
    $region10: #{textcnn_forward.1} parent=1 // pred_check
      _
    $region11: #{textcnn_forward.1} parent=1 // pred_check_branch
      %17 = sbr.rel (0) target = $region13
    $region12: #{textcnn_forward.1} parent=1 // pred_region
      _
    $region13: #{textcnn_forward.1} parent=1 // pred_fallthru
      _
    // Predicated region
    $region14: #{textcnn_forward.1} parent=1 // pred_check
      _
    $region15: #{textcnn_forward.1} parent=1 // pred_check_branch
      %19 = sbr.rel (0) target = $region17
    $region16: #{textcnn_forward.1} parent=1 // pred_region
      _
    $region17: #{textcnn_forward.1} parent=1 // pred_fallthru
      _
    // Predicated region
    $region18: #{textcnn_forward.1} parent=1 // pred_check
      _
    $region19: #{textcnn_forward.1} parent=1 // pred_check_branch
      %21 = sbr.rel (0) target = $region21
    $region20: #{textcnn_forward.1} parent=1 // pred_region
      _
    $region21: #{textcnn_forward.1} parent=1 // pred_fallthru
      _
    // Predicated region
    $region22: #{textcnn_forward.1} parent=1 // pred_check
      _
    $region23: #{textcnn_forward.1} parent=1 // pred_check_branch
      %23 = sbr.rel (0) target = $region25
    $region24: #{textcnn_forward.1} parent=1 // pred_region
      _
    $region25: #{textcnn_forward.1} parent=1 // pred_fallthru
      _
    %v24 = vld [vmem:[%s0] sm:$0xff]
    %v25 = vld [vmem:[%s0 + $0x8] sm:$0xff]
    %v26 = vld [vmem:[%s0 + $0x10] sm:$0x7]
    %v27 = vld [vmem:[%s0 + $0x18] sm:$0xff]
    %v28 = vld [vmem:[%s0 + $0x20] sm:$0xff]
    %v29 = vld [vmem:[%s0 + $0x28] sm:$0x7]
    %vm34 = vcmask 1046528
    %v35 = vrot.slane %v24, 1
    %v36 = vrot.slane %v25, 1
    %v37 = vsel %vm34, %v35, %v36
    %v38 = vrot.slane %v27, 1
    %v39 = vrot.slane %v28, 1
    %v40 = vsel %vm34, %v38, %v39
    %41 = vrot.lane.b32.xlu0 %v37, 32
    %v42 = vpop.permute.xlu0 %41
    %43 = vrot.lane.b32.xlu0 %v36, 32
    %v44 = vpop.permute.xlu0 %43
    %45 = vrot.lane.b32.xlu0 %v40, 32
    %v46 = vpop.permute.xlu0 %45
    %47 = vrot.lane.b32.xlu0 %v39, 32
    %v48 = vpop.permute.xlu0 %47
    %vm55 = vcmask 1045504
    %v56 = vrot.slane %v24, 2
    %v57 = vrot.slane %v25, 2
    %v58 = vsel %vm55, %v56, %v57
    %v59 = vrot.slane %v26, 2
    %v60 = vsel %vm55, %v57, %v59
    %v61 = vrot.slane %v27, 2
    %v62 = vrot.slane %v28, 2
    %v63 = vsel %vm55, %v61, %v62
    %v64 = vrot.slane %v29, 2
    %v65 = vsel %vm55, %v62, %v64
    %66 = vrot.lane.b32.xlu0 %v58, 64
    %v67 = vpop.permute.xlu0 %66
    %68 = vrot.lane.b32.xlu0 %v60, 64
    %v69 = vpop.permute.xlu0 %68
    %70 = vrot.lane.b32.xlu0 %v63, 64
    %v71 = vpop.permute.xlu0 %70
    %72 = vrot.lane.b32.xlu0 %v65, 64
    %v73 = vpop.permute.xlu0 %72
    %vm78 = vcmask 1044480
    %v79 = vrot.slane %v24, 3
    %v80 = vrot.slane %v25, 3
    %v81 = vsel %vm78, %v79, %v80
    %v82 = vrot.slane %v26, 3
    %v83 = vsel %vm78, %v80, %v82
    %v84 = vrot.slane %v27, 3
    %v85 = vrot.slane %v28, 3
    %v86 = vsel %vm78, %v84, %v85
    %v87 = vrot.slane %v29, 3
    %v88 = vsel %vm78, %v85, %v87
    %89 = vrot.lane.b32.xlu0 %v81, 96
    %v90 = vpop.permute.xlu0 %89
    %91 = vrot.lane.b32.xlu0 %v83, 96
    %v92 = vpop.permute.xlu0 %91
    %93 = vrot.lane.b32.xlu0 %v86, 96
    %v94 = vpop.permute.xlu0 %93
    %95 = vrot.lane.b32.xlu0 %v88, 96
    %v96 = vpop.permute.xlu0 %95
    %vm101 = vcmask 1043456
    %v102 = vrot.slane %v24, 4
    %v103 = vrot.slane %v25, 4
    %v104 = vsel %vm101, %v102, %v103
    %v105 = vrot.slane %v26, 4
    %v106 = vsel %vm101, %v103, %v105
    %v107 = vrot.slane %v27, 4
    %v108 = vrot.slane %v28, 4
    %v109 = vsel %vm101, %v107, %v108
    %v110 = vrot.slane %v29, 4
    %v111 = vsel %vm101, %v108, %v110
    %vm112 = vcmask 261120
    %v113 = vsel %vm112, %v24, %v42
    %v114 = vsel %vm112, %v25, %v44
    %v115 = vsel %vm112, %v27, %v46
    %v116 = vsel %vm112, %v28, %v48
    %vm117 = vcmask 523264
    %v118 = vsel %vm117, %v113, %v67
    %v119 = vsel %vm117, %v114, %v69
    %v120 = vsel %vm117, %v115, %v71
    %v121 = vsel %vm117, %v116, %v73
    %vm122 = vcmask 785408
    %v123 = vsel %vm122, %v118, %v90
    %v124 = vsel %vm122, %v119, %v92
    %v125 = vsel %vm122, %v120, %v94
    %v126 = vsel %vm122, %v121, %v96
    %v131 = vrot.slane %v104, 7
    %v132 = vrot.slane %v106, 7
    %v133 = vrot.slane %v109, 7
    %v134 = vrot.slane %v111, 7
    %vm135 = vcmask 1040384
    %v136 = vsel %vm135, %v123, %v131
    %vm137 = vcmask 1041409
    %v138 = vsel %vm137, %v123, %v131
    %v139 = vrot.slane %v138, 1
    %vm140 = vcmask 1042434
    %v141 = vsel %vm140, %v123, %v131
    %v142 = vrot.slane %v141, 2
    %vm143 = vcmask 1043459
    %v144 = vsel %vm143, %v123, %v131
    %v145 = vrot.slane %v144, 3
    %vm146 = vcmask 1044484
    %v147 = vsel %vm146, %v123, %v131
    %v148 = vrot.slane %v147, 4
    %vm149 = vcmask 1045509
    %v150 = vsel %vm149, %v123, %v131
    %v151 = vrot.slane %v150, 5
    %vm152 = vcmask 1046534
    %v153 = vsel %vm152, %v123, %v131
    %v154 = vrot.slane %v153, 6
    %v155 = vsel %vm34, %v131, %v123
    %v156 = vrot.slane %v155, 7
    %v157 = vsel %vm135, %v124, %v132
    %v158 = vsel %vm137, %v124, %v132
    %v159 = vrot.slane %v158, 1
    %v160 = vsel %vm140, %v124, %v132
    %v161 = vrot.slane %v160, 2
    %v162 = vsel %vm143, %v124, %v132
    %v163 = vrot.slane %v162, 3
    %v164 = vsel %vm146, %v124, %v132
    %v165 = vrot.slane %v164, 4
    %v166 = vsel %vm149, %v124, %v132
    %v167 = vrot.slane %v166, 5
    %v168 = vsel %vm152, %v124, %v132
    %v169 = vrot.slane %v168, 6
    %v170 = vsel %vm135, %v125, %v133
    %v171 = vsel %vm137, %v125, %v133
    %v172 = vrot.slane %v171, 1
    %v173 = vsel %vm140, %v125, %v133
    %v174 = vrot.slane %v173, 2
    %v175 = vsel %vm143, %v125, %v133
    %v176 = vrot.slane %v175, 3
    %v177 = vsel %vm146, %v125, %v133
    %v178 = vrot.slane %v177, 4
    %v179 = vsel %vm149, %v125, %v133
    %v180 = vrot.slane %v179, 5
    %v181 = vsel %vm152, %v125, %v133
    %v182 = vrot.slane %v181, 6
    %v183 = vsel %vm34, %v133, %v125
    %v184 = vrot.slane %v183, 7
    %v185 = vsel %vm135, %v126, %v134
    %v186 = vsel %vm137, %v126, %v134
    %v187 = vrot.slane %v186, 1
    %v188 = vsel %vm140, %v126, %v134
    %v189 = vrot.slane %v188, 2
    %v190 = vsel %vm143, %v126, %v134
    %v191 = vrot.slane %v190, 3
    %v192 = vsel %vm146, %v126, %v134
    %v193 = vrot.slane %v192, 4
    %v194 = vsel %vm149, %v126, %v134
    %v195 = vrot.slane %v194, 5
    %v196 = vsel %vm152, %v126, %v134
    %v197 = vrot.slane %v196, 6
    %v198 = vld [vmem:[%s1] sm:$0xff]
    %v199 = vld [vmem:[%s1 + $0x8] sm:$0xff]
    %v200 = vld [vmem:[%s1 + $0x10] sm:$0xff]
    %v201 = vld [vmem:[%s1 + $0x18] sm:$0xff]
    %v202 = vld [vmem:[%s1 + $0x20] sm:$0xff]
    %v203 = vld [vmem:[%s1 + $0x28] sm:$0xff]
    %v204 = vld [vmem:[%s1 + $0x30] sm:$0xff]
    %v205 = vld [vmem:[%s1 + $0x38] sm:$0xff]
    %v206 = vld [vmem:[%s1 + $0x40] sm:$0xff]
    %v207 = vld [vmem:[%s1 + $0x48] sm:$0xff]
    %v208 = vld [vmem:[%s1 + $0x50] sm:$0xff]
    %v209 = vld [vmem:[%s1 + $0x58] sm:$0xff]
    %v210 = vld [vmem:[%s1 + $0x60] sm:$0xff]
    %v211 = vld [vmem:[%s1 + $0x68] sm:$0xff]
    %v212 = vld [vmem:[%s1 + $0x70] sm:$0xff]
    %v213 = vld [vmem:[%s1 + $0x78] sm:$0xff]
    %v214 = vld [vmem:[%s1 + $0x80] sm:$0xff]
    %v215 = vld [vmem:[%s1 + $0x88] sm:$0xff]
    %v216 = vld [vmem:[%s1 + $0x90] sm:$0xff]
    %v217 = vld [vmem:[%s1 + $0x98] sm:$0xff]
    %218 = vst [vmem:[#allocation1] ss:$9 sm:$0xff] %v136
    %s219 = scalar_lea.vmem [#allocation1], 1
    %220 = vst [vmem:[%s219] ss:$9 sm:$0xff] %v139
    %s221 = scalar_lea.vmem [#allocation1], 2
    %222 = vst [vmem:[%s221] ss:$9 sm:$0xff] %v142
    %s223 = scalar_lea.vmem [#allocation1], 3
    %224 = vst [vmem:[%s223] ss:$9 sm:$0xff] %v145
    %s225 = scalar_lea.vmem [#allocation1], 4
    %226 = vst [vmem:[%s225] ss:$9 sm:$0xff] %v148
    %s227 = scalar_lea.vmem [#allocation1], 5
    %228 = vst [vmem:[%s227] ss:$9 sm:$0xff] %v151
    %s229 = scalar_lea.vmem [#allocation1], 6
    %230 = vst [vmem:[%s229] ss:$9 sm:$0xff] %v154
    %s231 = scalar_lea.vmem [#allocation1], 7
    %232 = vst [vmem:[%s231] ss:$9 sm:$0xff] %v156
    %v233 = vld [vmem:[#allocation1] sm:$0xff]
    %v234 = vld [vmem:[#allocation1 + $0x9] sm:$0xff]
    %235 = vst [vmem:[#allocation1] ss:$9 sm:$0xff] %v157
    %236 = vst [vmem:[%s219] ss:$9 sm:$0xff] %v159
    %237 = vst [vmem:[%s221] ss:$9 sm:$0xff] %v161
    %238 = vst [vmem:[%s223] ss:$9 sm:$0xff] %v163
    %239 = vst [vmem:[%s225] ss:$9 sm:$0xff] %v165
    %240 = vst [vmem:[%s227] ss:$9 sm:$0xff] %v167
    %241 = vst [vmem:[%s229] ss:$9 sm:$0xff] %v169
    %242 = vst [vmem:[%s231] ss:$9 sm:$0xff] %v170
    %v243 = vld [vmem:[#allocation1] sm:$0xff]
    %v244 = vld [vmem:[#allocation1 + $0x9] sm:$0xff]
    %245 = vst [vmem:[#allocation1] ss:$9 sm:$0xff] %v172
    %246 = vst [vmem:[%s219] ss:$9 sm:$0xff] %v174
    %247 = vst [vmem:[%s221] ss:$9 sm:$0xff] %v176
    %248 = vst [vmem:[%s223] ss:$9 sm:$0xff] %v178
    %249 = vst [vmem:[%s225] ss:$9 sm:$0xff] %v180
    %250 = vst [vmem:[%s227] ss:$9 sm:$0xff] %v182
    %251 = vst [vmem:[%s229] ss:$9 sm:$0xff] %v184
    %252 = vst [vmem:[%s231] ss:$9 sm:$0xff] %v185
    %v253 = vld [vmem:[#allocation1] sm:$0xff]
    %v254 = vld [vmem:[#allocation1 + $0x9] sm:$0xff]
    %255 = vst [vmem:[#allocation1] ss:$9 sm:$0xff] %v187
    %256 = vst [vmem:[%s219] ss:$9 sm:$0xff] %v189
    %257 = vst [vmem:[%s221] ss:$9 sm:$0xff] %v191
    %258 = vst [vmem:[%s223] ss:$9 sm:$0xff] %v193
    %259 = vst [vmem:[%s225] ss:$9 sm:$0xff] %v195
    %260 = vst [vmem:[%s227] ss:$9 sm:$0xff] %v197
    %v261 = vld [vmem:[#allocation1] sm:$0xff]
    %v262 = vld [vmem:[#allocation1 + $0x9] sm:$0xff]
    %v267 = vsel %vm112, %v234, 0
    %v269 = vsel %vm112, %v244, 0
    %v271 = vsel %vm112, %v254, 0
    %v273 = vsel %vm112, %v262, 0
    %275 = vmatpush.msra.mxu0 %v213
    %276 = vmatpush.msra.mxu0 %v212
    %277 = vmatpush.msra.mxu0 %v211
    %278 = vmatpush.msra.mxu0 %v210
    %279 = vmatpush.msra.mxu0 %v209
    %280 = vmatpush.msra.mxu0 %v208
    %281 = vmatpush.msra.mxu0 %v207
    %282 = vmatpush.msra.mxu0 %v206
    %283 = vmatpush.msra.mxu0 %v205
    %284 = vmatpush.msra.mxu0 %v204
    %285 = vmatpush.msra.mxu0 %v203
    %286 = vmatpush.msra.mxu0 %v202
    %287 = vmatpush.msra.mxu0 %v201
    %288 = vmatpush.msra.mxu0 %v200
    %289 = vmatpush.msra.mxu0 %v199
    %290 = vmatpush.msra.mxu0 %v198
    %291 = vmatmul.f32.gmra.mxu0 %v233
    %v292 = vpop.f32.mrf.mxu0
    %v293 = vadd.f32 0.0, %v292
    %294 = vmatmul.f32.gmra.mxu0 %v243
    %v295 = vpop.f32.mrf.mxu0
    %v296 = vadd.f32 0.0, %v295
    %297 = vmatmul.f32.gmra.mxu0 %v253
    %v298 = vpop.f32.mrf.mxu0
    %v299 = vadd.f32 0.0, %v298
    %300 = vmatmul.f32.gmra.mxu0 %v261
    %v301 = vpop.f32.mrf.mxu0
    %v302 = vadd.f32 0.0, %v301
    %303 = vdwg.mxu0
    %304 = vmatpush.msra.mxu0 0.0
    %305 = vmatpush.msra.mxu0 0.0
    %306 = vmatpush.msra.mxu0 0.0
    %307 = vmatpush.msra.mxu0 0.0
    %308 = vmatpush.msra.mxu0 0.0
    %309 = vmatpush.msra.mxu0 0.0
    %310 = vmatpush.msra.mxu0 0.0
    %311 = vmatpush.msra.mxu0 0.0
    %312 = vmatpush.msra.mxu0 0.0
    %313 = vmatpush.msra.mxu0 0.0
    %314 = vmatpush.msra.mxu0 0.0
    %315 = vmatpush.msra.mxu0 0.0
    %316 = vmatpush.msra.mxu0 %v217
    %317 = vmatpush.msra.mxu0 %v216
    %318 = vmatpush.msra.mxu0 %v215
    %319 = vmatpush.msra.mxu0 %v214
    %320 = vmatmul.f32.gmra.mxu0 %v267
    %v321 = vpop.f32.mrf.mxu0
    %v322 = vadd.f32 %v293, %v321
    %323 = vmatmul.f32.gmra.mxu0 %v269
    %v324 = vpop.f32.mrf.mxu0
    %v325 = vadd.f32 %v296, %v324
    %326 = vmatmul.f32.gmra.mxu0 %v271
    %v327 = vpop.f32.mrf.mxu0
    %v328 = vadd.f32 %v299, %v327
    %329 = vmatmul.f32.gmra.mxu0 %v273
    %v330 = vpop.f32.mrf.mxu0
    %v331 = vadd.f32 %v302, %v330
    %332 = vdwg.mxu0
    %v337 = vrot.slane %v322, 1
    %v338 = vrot.slane %v322, 2
    %v339 = vrot.slane %v322, 3
    %v340 = vrot.slane %v322, 4
    %v341 = vrot.slane %v322, 5
    %v342 = vrot.slane %v322, 6
    %v343 = vrot.slane %v322, 7
    %v344 = vrot.slane %v325, 1
    %v345 = vrot.slane %v325, 2
    %v346 = vrot.slane %v325, 3
    %v347 = vrot.slane %v325, 4
    %v348 = vrot.slane %v325, 5
    %v349 = vrot.slane %v325, 6
    %v350 = vrot.slane %v325, 7
    %v351 = vrot.slane %v328, 1
    %v352 = vrot.slane %v328, 2
    %v353 = vrot.slane %v328, 3
    %v354 = vrot.slane %v328, 4
    %v355 = vrot.slane %v328, 5
    %v356 = vrot.slane %v328, 6
    %v357 = vrot.slane %v328, 7
    %v358 = vrot.slane %v331, 1
    %v359 = vrot.slane %v331, 2
    %v360 = vrot.slane %v331, 3
    %v361 = vrot.slane %v331, 4
    %v362 = vrot.slane %v331, 5
    %v363 = vlaneseq
    %v364 = vshrl.u32 %v363, 7
    %v365 = vadd.s32 %v364, 8
    %v366 = vld [vmem:[%s3] sm:$0x1]
    %v367 = vperm.slane %v366, 0
    %vm368 = vcmp.lt.s32.totalorder %v364, %v367
    %vm369 = vcmp.lt.s32.totalorder %v365, %v367
    %370 = vst [vmem:[#allocation1] ss:$9 sm:$0xff] %v322
    %s371 = scalar_lea.vmem [#allocation1], 1
    %372 = vst [vmem:[%s371] ss:$9 sm:$0xff] %v337
    %s373 = scalar_lea.vmem [#allocation1], 2
    %374 = vst [vmem:[%s373] ss:$9 sm:$0xff] %v338
    %s375 = scalar_lea.vmem [#allocation1], 3
    %376 = vst [vmem:[%s375] ss:$9 sm:$0xff] %v339
    %s377 = scalar_lea.vmem [#allocation1], 4
    %378 = vst [vmem:[%s377] ss:$9 sm:$0xff] %v340
    %s379 = scalar_lea.vmem [#allocation1], 5
    %380 = vst [vmem:[%s379] ss:$9 sm:$0xff] %v341
    %s381 = scalar_lea.vmem [#allocation1], 6
    %382 = vst [vmem:[%s381] ss:$9 sm:$0xff] %v342
    %s383 = scalar_lea.vmem [#allocation1], 7
    %384 = vst [vmem:[%s383] ss:$9 sm:$0xff] %v343
    %v385 = vld [vmem:[#allocation1] sm:$0xff]
    %386 = vst [vmem:[#allocation1] ss:$9 sm:$0xff] %v325
    %387 = vst [vmem:[%s371] ss:$9 sm:$0xff] %v344
    %388 = vst [vmem:[%s373] ss:$9 sm:$0xff] %v345
    %389 = vst [vmem:[%s375] ss:$9 sm:$0xff] %v346
    %390 = vst [vmem:[%s377] ss:$9 sm:$0xff] %v347
    %391 = vst [vmem:[%s379] ss:$9 sm:$0xff] %v348
    %392 = vst [vmem:[%s381] ss:$9 sm:$0xff] %v349
    %v393 = vld [vmem:[#allocation1] sm:$0xff]
    %394 = vst [vmem:[#allocation1] ss:$9 sm:$0xff] %v350
    %395 = vst [vmem:[%s371] ss:$9 sm:$0xff] %v328
    %396 = vst [vmem:[%s373] ss:$9 sm:$0xff] %v351
    %397 = vst [vmem:[%s375] ss:$9 sm:$0xff] %v352
    %398 = vst [vmem:[%s377] ss:$9 sm:$0xff] %v353
    %399 = vst [vmem:[%s379] ss:$9 sm:$0xff] %v354
    %400 = vst [vmem:[%s381] ss:$9 sm:$0xff] %v355
    %401 = vst [vmem:[%s383] ss:$9 sm:$0xff] %v356
    %v402 = vld [vmem:[#allocation1] sm:$0xff]
    %403 = vst [vmem:[#allocation1] ss:$9 sm:$0xff] %v357
    %404 = vst [vmem:[%s371] ss:$9 sm:$0xff] %v331
    %405 = vst [vmem:[%s373] ss:$9 sm:$0xff] %v358
    %406 = vst [vmem:[%s375] ss:$9 sm:$0xff] %v359
    %407 = vst [vmem:[%s377] ss:$9 sm:$0xff] %v360
    %408 = vst [vmem:[%s379] ss:$9 sm:$0xff] %v361
    %409 = vst [vmem:[%s381] ss:$9 sm:$0xff] %v362
    %v410 = vld [vmem:[#allocation1] sm:$0xff]
    %v415 = vsel %vm368, %v385, -3e+38
    %v416 = vsel %vm369, %v393, -3e+38
    %v417 = vsel %vm368, %v402, -3e+38
    %v418 = vsel %vm369, %v410, -3e+38
    %v419 = vsel %vm117, %v415, -inf
    %vm420 = vcmask 522240
    %v421 = vsel %vm420, %v416, -inf
    %v422 = vmax.f32 %v419, %v421
    %v423 = vrot.slane %v422, 4
    %v424 = vmax.f32 %v422, %v423
    %v425 = vrot.slane %v424, 2
    %v426 = vmax.f32 %v424, %v425
    %v427 = vrot.slane %v426, 1
    %v428 = vmax.f32 %v426, %v427
    %v429 = vsel %vm117, %v417, -inf
    %v430 = vsel %vm420, %v418, -inf
    %v431 = vmax.f32 %v429, %v430
    %v432 = vrot.slane %v431, 4
    %v433 = vmax.f32 %v431, %v432
    %v434 = vrot.slane %v433, 2
    %v435 = vmax.f32 %v433, %v434
    %v436 = vrot.slane %v435, 1
    %v437 = vmax.f32 %v435, %v436
    %v438 = vld [vmem:[%s2] sm:$0x1]
    %v440 = vperm.slane %v438, 0
    %v442 = vadd.f32 %v428, %v440
    %v443 = vadd.f32 %v437, %v440
    %v444 = vmax.f32 %v442, 0.0
    %v445 = vmax.f32 %v443, 0.0
    %v446 = vld [vmem:[%s4] sm:$0xff]
    %v447 = vld [vmem:[%s4 + $0x8] sm:$0xff]
    %v448 = vld [vmem:[%s4 + $0x10] sm:$0xff]
    %v449 = vld [vmem:[%s4 + $0x18] sm:$0xff]
    %v450 = vld [vmem:[%s4 + $0x20] sm:$0xff]
    %v451 = vld [vmem:[%s4 + $0x28] sm:$0xff]
    %v452 = vld [vmem:[%s4 + $0x30] sm:$0xff]
    %v453 = vld [vmem:[%s4 + $0x38] sm:$0xff]
    %v454 = vld [vmem:[%s5] sm:$0x1]
    %v456 = vperm.slane %v454, 0
    %v460 = vrot.slane %v445, 7
    %v461 = vsel %vm137, %v460, %v444
    %v462 = vsel %vm117, %v461, 0
    %464 = vmatpush.msra.mxu0 0.0
    %465 = vmatpush.msra.mxu0 0.0
    %466 = vmatpush.msra.mxu0 0.0
    %467 = vmatpush.msra.mxu0 0.0
    %468 = vmatpush.msra.mxu0 0.0
    %469 = vmatpush.msra.mxu0 0.0
    %470 = vmatpush.msra.mxu0 0.0
    %471 = vmatpush.msra.mxu0 0.0
    %472 = vmatpush.msra.mxu0 %v453
    %473 = vmatpush.msra.mxu0 %v452
    %474 = vmatpush.msra.mxu0 %v451
    %475 = vmatpush.msra.mxu0 %v450
    %476 = vmatpush.msra.mxu0 %v449
    %477 = vmatpush.msra.mxu0 %v448
    %478 = vmatpush.msra.mxu0 %v447
    %479 = vmatpush.msra.mxu0 %v446
    %480 = vmatmul.f32.gmra.mxu0 %v462
    %v481 = vpop.f32.mrf.mxu0
    %v482 = vadd.f32 %v456, %v481
    %483 = vdwg.mxu0
    %vm484 = vcmask 9216
    %485 = vst.msk [vmem:[#allocation2] sm:$0x3] %vm484, %v482
    // Predicated region
    $region26: #{textcnn_forward.1} parent=1 // pred_check
      _
    $region27: #{textcnn_forward.1} parent=1 // pred_check_branch
      %487 = sbr.rel (0) target = $region29
    $region28: #{textcnn_forward.1} parent=1 // pred_region
      %489 = vsyncadd [#allocation3], 0
      %s491 = sshll.u32 [#allocation2], 4
      %s492 = int_to_ptr.vmem [resolvable:$true] %s491
      %s493 = sshll.u32 %s6, 4
      %s494 = int_to_ptr.hbm [resolvable:$true] %s493
      %496 = dma.vmem_to_hbm [thread:$0]  %s492, 32, %s494, [#allocation3]
    $region29: #{textcnn_forward.1} parent=1 // pred_fallthru
      _
    // Predicated region
    $region30: #{textcnn_forward.1} parent=1 // pred_check
      _
    $region31: #{textcnn_forward.1} parent=1 // pred_check_branch
      %498 = sbr.rel (0) target = $region33
    $region32: #{textcnn_forward.1} parent=1 // pred_region
      %500 = dma.done [#allocation3], 32
    $region33: #{textcnn_forward.1} parent=1 // pred_fallthru
      _
    %501 = vsyncpa [#allocation3], 1

</llo_original>
